<compile_context>
chip_gen: v6e
topology: v6e:2x2x1
jax: 0.10.0
libtpu: 0.0.40
codegen_flags: <defaults>
</compile_context>

<pallas_src>
import jax
import jax.numpy as jnp
from jax.experimental import pallas as pl
from jax.experimental.pallas import tpu as pltpu

_LANE = 128      # lane width (last dim granularity)
_SUBLANE = 8     # sublane count (second-to-last dim granularity, f32)


def _classhead_kernel(x_ref, w_ref, b_ref, o_ref):
    # x_ref: (1, C, t_hw)    activation tile (channels on sublanes, pixels on lanes)
    # w_ref: (OCp, C)        1x1-conv weight, OC padded to a sublane multiple
    # b_ref: (OCp, 1)        bias column (f32)
    # o_ref: (1, OCp, t_hw)  lane-dense output tile
    acc = jnp.dot(w_ref[...], x_ref[0],
                  preferred_element_type=jnp.float32)        # (OCp, t_hw) f32
    o_ref[0] = (acc + b_ref[...]).astype(o_ref.dtype)


def _round_up(x, m):
    return ((x + m - 1) // m) * m


def _pick_hw_tile(hw_padded, target):
    """Largest multiple of 128 that divides hw_padded and is <= target."""
    best = _LANE
    t = _LANE
    limit = min(hw_padded, target)
    while t <= limit:
        if hw_padded % t == 0:
            best = t
        t += _LANE
    return best


def class_head_forward(x_nchw, weight, bias, num_anchors=3, *, hw_tile_target=2048):
    """x_nchw: (N, C, H, W); weight: (OC, C) (1x1 conv squeezed); bias: (OC,)."""
    N, C, H, W = x_nchw.shape
    OC = weight.shape[0]
    assert OC == num_anchors * 2
    HW = H * W

    # NCHW -> (N, C, H*W): pure reshape of contiguous dims, no data movement.
    x_flat = x_nchw.reshape(N, C, HW)

    # Pad pixel axis to a lane multiple so every load/store is lane-dense.
    hw_padded = _round_up(HW, _LANE)
    if hw_padded != HW:
        x_flat = jnp.pad(x_flat, ((0, 0), (0, 0), (0, hw_padded - HW)))
    t_hw = _pick_hw_tile(hw_padded, hw_tile_target)

    # Pad OC (=6) up to one sublane so output stores are unmasked.
    OCp = _round_up(OC, _SUBLANE)
    w_p = jnp.zeros((OCp, C), x_flat.dtype).at[:OC].set(weight.astype(x_flat.dtype))
    b_p = jnp.zeros((OCp, 1), jnp.float32).at[:OC, 0].set(bias.astype(jnp.float32))

    grid = (N, hw_padded // t_hw)

    out_padded = pl.pallas_call(
        _classhead_kernel,
        out_shape=jax.ShapeDtypeStruct((N, OCp, hw_padded), x_flat.dtype),
        grid_spec=pltpu.PrefetchScalarGridSpec(
            num_scalar_prefetch=0,
            grid=grid,
            in_specs=[
                pl.BlockSpec((1, C, t_hw), lambda n, j: (n, 0, j)),
                pl.BlockSpec((OCp, C), lambda n, j: (0, 0)),
                pl.BlockSpec((OCp, 1), lambda n, j: (0, 0)),
            ],
            out_specs=pl.BlockSpec((1, OCp, t_hw), lambda n, j: (n, 0, j)),
        ),
        compiler_params=pltpu.CompilerParams(
            dimension_semantics=("parallel", "parallel"),
            vmem_limit_bytes=32 * 1024 * 1024,
        ),
    )(x_flat, w_p, b_p)

    # Small epilogue on the (N, OC, HW) result (~OC/C of the activation size):
    out = out_padded[:, :OC, :HW]            # drop OC / pixel padding
    out = jnp.transpose(out, (0, 2, 1))      # (N, HW, OC)  == NHWC flattened
    return out.reshape(N, HW * num_anchors, 2)


def _reference_forward(x_nchw, weight, bias, num_anchors=3):
    """Pure-JAX reference mirroring the PyTorch forward."""
    N, C, H, W = x_nchw.shape
    out = jnp.einsum("nchw,oc->nohw", x_nchw, weight) + bias[None, :, None, None]
    out = jnp.transpose(out, (0, 2, 3, 1))   # NCHW -> NHWC
    return out.reshape(N, -1, 2)


if __name__ == "__main__":
    # Small shapes consistent with the module: inchannels=32, num_anchors=3.
    N, C, H, W = 2, 32, 16, 16
    num_anchors = 3
    OC = num_anchors * 2

    key = jax.random.PRNGKey(0)
    kx, kw, kb = jax.random.split(key, 3)

    x = jax.random.normal(kx, (N, C, H, W), dtype=jnp.float32)
    # Deterministic synthetic parameters (Conv2d 1x1 weight squeezed to (OC, C)).
    weight = jax.random.normal(kw, (OC, C), dtype=jnp.float32) * 0.05
    bias = jax.random.normal(kb, (OC,), dtype=jnp.float32) * 0.05

    out = class_head_forward(x, weight, bias, num_anchors)
    out = jax.block_until_ready(out)

    ref = _reference_forward(x, weight, bias, num_anchors)
    assert out.shape == (N, H * W * num_anchors, 2), out.shape
    assert jnp.allclose(out, ref, atol=1e-5, rtol=1e-5), "mismatch vs reference"

    print("KERNEL_OK")
</pallas_src>

<mosaic_0001>
module attributes {stable_mosaic.version = 11 : i64} {
  func.func @_classhead_kernel(%arg0: i32, %arg1: i32, %arg2: memref<1x32x256xf32, #tpu.memory_space<vmem>>, %arg3: memref<8x32xf32, #tpu.memory_space<vmem>>, %arg4: memref<8x1xf32, #tpu.memory_space<vmem>>, %arg5: memref<1x8x256xf32, #tpu.memory_space<vmem>>) attributes {dimension_semantics = [#tpu.dimension_semantics<parallel>, #tpu.dimension_semantics<parallel>], iteration_bounds = array<i64: 2, 1>, scalar_prefetch = 0 : i64, scratch_operands = 0 : i64, tpu.core_type = #tpu.core_type<tc>, window_params = [{transform_indices = @transform_0, window_bounds = array<i64: 1, 32, 256>}, {pipeline_mode = #tpu.pipeline_mode<synchronous>, transform_indices = @transform_1, window_bounds = array<i64: 8, 32>}, {pipeline_mode = #tpu.pipeline_mode<synchronous>, transform_indices = @transform_2, window_bounds = array<i64: 8, 1>}, {transform_indices = @transform_3, window_bounds = array<i64: 1, 8, 256>}]} {
    %c0 = arith.constant 0 : index
    %c0_0 = arith.constant 0 : index
    %0 = vector.load %arg3[%c0, %c0_0] : memref<8x32xf32, #tpu.memory_space<vmem>>, vector<8x32xf32>
    %c0_1 = arith.constant 0 : index
    %c0_2 = arith.constant 0 : index
    %c0_3 = arith.constant 0 : index
    %1 = vector.load %arg2[%c0_1, %c0_2, %c0_3] : memref<1x32x256xf32, #tpu.memory_space<vmem>>, vector<1x32x256xf32>
    %2 = vector.shape_cast %1 : vector<1x32x256xf32> to vector<32x256xf32>
    %cst = arith.constant dense<0.000000e+00> : vector<8x256xf32>
    %3 = tpu.matmul %0, %2, %cst {dimension_numbers = #tpu.dot_dimension_numbers<[1], [0], [0], [1], [0, 0, 1, 1], [], []>} : vector<8x32xf32>, vector<32x256xf32>, vector<8x256xf32> -> vector<8x256xf32>
    %c0_4 = arith.constant 0 : index
    %c0_5 = arith.constant 0 : index
    %4 = vector.load %arg4[%c0_4, %c0_5] : memref<8x1xf32, #tpu.memory_space<vmem>>, vector<8x1xf32>
    %5 = vector.broadcast %4 : vector<8x1xf32> to vector<8x256xf32>
    %6 = arith.addf %3, %5 : vector<8x256xf32>
    %c0_6 = arith.constant 0 : index
    %c0_7 = arith.constant 0 : index
    %c0_8 = arith.constant 0 : index
    %7 = vector.load %arg5[%c0_6, %c0_7, %c0_8] : memref<1x8x256xf32, #tpu.memory_space<vmem>>, vector<1x8x256xf32>
    %8 = vector.shape_cast %7 : vector<1x8x256xf32> to vector<8x256xf32>
    %9 = vector.shape_cast %6 : vector<8x256xf32> to vector<1x8x256xf32>
    tpu.vector_store %arg5[%c0_6, %c0_7, %c0_8], %9 {strides = array<i32>} : memref<1x8x256xf32, #tpu.memory_space<vmem>>, vector<1x8x256xf32>,
    return
  }
  func.func @transform_0(%arg0: i32, %arg1: i32) -> (i32, i32, i32) {
    %c0_i32 = arith.constant 0 : i32
    %c0_i32_0 = arith.constant 0 : i32
    return %arg0, %c0_i32, %arg1 : i32, i32, i32
  }
  func.func @transform_1(%arg0: i32, %arg1: i32) -> (i32, i32) {
    %c0_i32 = arith.constant 0 : i32
    %c0_i32_0 = arith.constant 0 : i32
    %c0_i32_1 = arith.constant 0 : i32
    return %c0_i32, %c0_i32_0 : i32, i32
  }
  func.func @transform_2(%arg0: i32, %arg1: i32) -> (i32, i32) {
    %c0_i32 = arith.constant 0 : i32
    %c0_i32_0 = arith.constant 0 : i32
    %c0_i32_1 = arith.constant 0 : i32
    return %c0_i32, %c0_i32_0 : i32, i32
  }
  func.func @transform_3(%arg0: i32, %arg1: i32) -> (i32, i32, i32) {
    %c0_i32 = arith.constant 0 : i32
    %c0_i32_0 = arith.constant 0 : i32
    return %arg0, %c0_i32, %arg1 : i32, i32, i32
  }
}

</mosaic_0001>

<llo_original>
// kernel: tpu_custom_call.1
$region0: #{tpu_custom_call.1}
  #allocation0 [shape = 'u32[]', space=smem, size = 0x4, offset = 0x4, fixed_abs, tag = 'smem constant byte address 0x4 - core index']
  #allocation1 [shape = 'u32[144,128]{1,0:T(1,128)}', space=vmem, size = 0x12000, scoped, tag = 'internal scratch']
  %s0 = inlined_call_operand.hbm [shape: f32[2,32,256], index: 0, kind: input, shape index: {}]
  %s1 = inlined_call_operand.vmem [shape: f32[8,32], index: 1, kind: input, shape index: {}]
  %s2 = inlined_call_operand.vmem [shape: f32[8,1], index: 2, kind: input, shape index: {}]
  %s3 = inlined_call_operand.hbm [shape: f32[2,8,256], index: 3, kind: output, shape index: {}]
  %s4 = sld [smem:[#allocation0]]
  $region49: #{tpu_custom_call.1} parent=0
    _
  %s6 = ssub.s32 1, %s4
  %s7 = scalar_select 0, %s6, %s4
  $region1: #{tpu_custom_call.1} parent=0
    #allocation2 [shape = 'u8[65536]{0}', space=vmem, size = 0x10000, scoped, tag = 'input window, operand 0']
    #allocation3 [shape = 's32[2]{0}', space=sflag, size = 0x8, scoped, tag = 'scoped memory for tpu_custom_call.1']
    #allocation4 [shape = 's32[2]{0}', space=sflag, size = 0x8, scoped, tag = 'scoped memory for tpu_custom_call.1']
    #allocation5 [shape = 'u8[16384]{0}', space=vmem, size = 0x4000, scoped, tag = 'output window, operand 0']
    %8 = vsyncpa [#allocation3], 0
    %s9 = scalar_lea.sflag [#allocation3], 1
    %10 = vsyncpa %s9, 0
    %11 = vsyncpa [#allocation4], 0
    %s12 = scalar_lea.sflag [#allocation4], 1
    %13 = vsyncpa %s12, 0
    loop: start=0, step=1, limit=4
    $region2: #{tpu_custom_call.1} parent=1 // loop_pre_header
      _
    $region3: #{tpu_custom_call.1} parent=1 // loop_header
      %s15 = sphi 0, %s19
      %p16 = scmp.ge.s32.totalorder %s15, 4
      %s22 = sphi 0, %s34
      %s23 = sphi 0, %s30
      %s24 = sphi 0, %s22
      %s25 = sphi 0, %s23
      %s26 = sphi 0, %s24
      %s27 = sphi 0, %s25
      %s39 = sphi 0, %s41
      %s42 = sphi 0, %s39
      %s43 = sphi 0, %s42
      %s59 = sphi 0, %s43
      %s63 = sphi 0, %s63
      %s65 = sphi 0, %s63
      %s66 = sphi 0, %s65
      %s80 = sphi 0, %s66
      %s84 = sphi 0, %s84
      %s86 = sphi 0, %s84
      %s87 = sphi 0, %s86
      %s101 = sphi 0, %s87
      %s109 = sphi 0, %s111
      %s112 = sphi 0, %s109
      %s113 = sphi 0, %s112
      %s129 = sphi 0, %s113
    $region4: #{tpu_custom_call.1} parent=1 // loop_header_branch
      %18 = sbr.rel (%p16) target = $region8
    $region5: #{tpu_custom_call.1} parent=1 // loop_body
      %s20 = ssub.s32 %s15, 1
      %s21 = ssub.s32 %s15, 2
      %s28 = sadd.s32 1, %s23
      %p29 = scmp.ge.s32.totalorder %s28, 1
      %s30 = scalar_select %p29, 0, %s28
      %s31 = sadd.s32 1, %s22
      %s32 = scalar_select %p29, %s31, %s22
      %p33 = scmp.ge.s32.totalorder %s32, 2
      %s34 = scalar_select %p33, 0, %s32
      %s35 = ssub.s32 %s22, %s34
      %s36 = ssub.s32 %s23, %s30
      %s37 = sor.u32 %s35, %s36
      %p38 = scmp.eq.s32.totalorder %s37, 0
      %s40 = sadd.s32 %s39, 1
      %s41 = scalar_select %p38, %s39, %s40
      %p44 = pneg %p38
      %p45 = scmp.eq.s32.totalorder %s15, 1
      %p46 = por %p44, %p45
      %p47 = scmp.ne.s32.totalorder %s39, %s42
      %p48 = scmp.eq.s32.totalorder %s15, 0
      %p49 = por %p47, %p48
      %p50 = scmp.ne.s32.totalorder %s39, %s42
      %p51 = scmp.eq.s32.totalorder %s20, 1
      %p52 = por %p50, %p51
      %p53 = scmp.ne.s32.totalorder %s42, %s43
      %p54 = scmp.eq.s32.totalorder %s20, 0
      %p55 = por %p53, %p54
      %p56 = scmp.ne.s32.totalorder %s42, %s43
      %p57 = scmp.eq.s32.totalorder %s21, 1
      %p58 = por %p56, %p57
      %p60 = scmp.ne.s32.totalorder %s43, %s59
      %p61 = scmp.eq.s32.totalorder %s21, 0
      %p62 = por %p60, %p61
      %s64 = sadd.s32 %s63, 1
      %p67 = scmp.eq.s32.totalorder %s15, 1
      %p68 = scmp.ne.s32.totalorder %s63, %s65
      %p69 = scmp.eq.s32.totalorder %s15, 0
      %p70 = por %p68, %p69
      %p71 = scmp.ne.s32.totalorder %s63, %s65
      %p72 = scmp.eq.s32.totalorder %s20, 1
      %p73 = por %p71, %p72
      %p74 = scmp.ne.s32.totalorder %s65, %s66
      %p75 = scmp.eq.s32.totalorder %s20, 0
      %p76 = por %p74, %p75
      %p77 = scmp.ne.s32.totalorder %s65, %s66
      %p78 = scmp.eq.s32.totalorder %s21, 1
      %p79 = por %p77, %p78
      %p81 = scmp.ne.s32.totalorder %s66, %s80
      %p82 = scmp.eq.s32.totalorder %s21, 0
      %p83 = por %p81, %p82
      %s85 = sadd.s32 %s84, 1
      %p88 = scmp.eq.s32.totalorder %s15, 1
      %p89 = scmp.ne.s32.totalorder %s84, %s86
      %p90 = scmp.eq.s32.totalorder %s15, 0
      %p91 = por %p89, %p90
      %p92 = scmp.ne.s32.totalorder %s84, %s86
      %p93 = scmp.eq.s32.totalorder %s20, 1
      %p94 = por %p92, %p93
      %p95 = scmp.ne.s32.totalorder %s86, %s87
      %p96 = scmp.eq.s32.totalorder %s20, 0
      %p97 = por %p95, %p96
      %p98 = scmp.ne.s32.totalorder %s86, %s87
      %p99 = scmp.eq.s32.totalorder %s21, 1
      %p100 = por %p98, %p99
      %p102 = scmp.ne.s32.totalorder %s87, %s101
      %p103 = scmp.eq.s32.totalorder %s21, 0
      %p104 = por %p102, %p103
      %s105 = ssub.s32 %s22, %s34
      %s106 = ssub.s32 %s23, %s30
      %s107 = sor.u32 %s105, %s106
      %p108 = scmp.eq.s32.totalorder %s107, 0
      %s110 = sadd.s32 %s109, 1
      %s111 = scalar_select %p108, %s109, %s110
      %p114 = pneg %p108
      %p115 = scmp.eq.s32.totalorder %s15, 1
      %p116 = por %p114, %p115
      %p117 = scmp.ne.s32.totalorder %s109, %s112
      %p118 = scmp.eq.s32.totalorder %s15, 0
      %p119 = por %p117, %p118
      %p120 = scmp.ne.s32.totalorder %s109, %s112
      %p121 = scmp.eq.s32.totalorder %s20, 1
      %p122 = por %p120, %p121
      %p123 = scmp.ne.s32.totalorder %s112, %s113
      %p124 = scmp.eq.s32.totalorder %s20, 0
      %p125 = por %p123, %p124
      %p126 = scmp.ne.s32.totalorder %s112, %s113
      %p127 = scmp.eq.s32.totalorder %s21, 1
      %p128 = por %p126, %p127
      %p130 = scmp.ne.s32.totalorder %s113, %s129
      %p131 = scmp.eq.s32.totalorder %s21, 0
      %p132 = por %p130, %p131
      %p133 = scmp.le.s32.totalorder 1, %s15
      %p134 = scmp.lt.s32.totalorder %s15, 3
      %p135 = pnand %p133, %p134
      %p136 = pneg %p135
      // Predicated region
      $region9: #{tpu_custom_call.1} parent=5 // pred_check
        _
      $region10: #{tpu_custom_call.1} parent=5 // pred_check_branch
        %138 = sbr.rel (%p135) target = $region12
      $region11: #{tpu_custom_call.1} parent=5 // pred_region
        %s139 = ssub.s32 %s15, 1
        // Predicated region
        $region13: #{tpu_custom_call.1} parent=11 // pred_check
          %p140 = pneg %p76
        $region14: #{tpu_custom_call.1} parent=11 // pred_check_branch
          %142 = sbr.rel (%p140) target = $region16
        $region15: #{tpu_custom_call.1} parent=11 // pred_region
          _
        $region16: #{tpu_custom_call.1} parent=11 // pred_fallthru
          _
        // Predicated region
        $region17: #{tpu_custom_call.1} parent=11 // pred_check
          %p143 = pneg %p97
        $region18: #{tpu_custom_call.1} parent=11 // pred_check_branch
          %145 = sbr.rel (%p143) target = $region20
        $region19: #{tpu_custom_call.1} parent=11 // pred_region
          _
        $region20: #{tpu_custom_call.1} parent=11 // pred_fallthru
          _
      $region12: #{tpu_custom_call.1} parent=5 // pred_fallthru
        _
      %p146 = scmp.lt.s32.totalorder %s15, 2
      // Predicated region
      $region21: #{tpu_custom_call.1} parent=5 // pred_check
        %p147 = pneg %p146
      $region22: #{tpu_custom_call.1} parent=5 // pred_check_branch
        %149 = sbr.rel (%p147) target = $region24
      $region23: #{tpu_custom_call.1} parent=5 // pred_region
        // Predicated region
        $region25: #{tpu_custom_call.1} parent=23 // pred_check
          %p150 = pneg %p49
        $region26: #{tpu_custom_call.1} parent=23 // pred_check_branch
          %152 = sbr.rel (%p150) target = $region28
        $region27: #{tpu_custom_call.1} parent=23 // pred_region
          %s153 = sand.u32 %s39, 1
          %s154 = scalar_lea.sflag [#allocation3], %s153
          %s155 = sand.u32 %s39, 1
          %s156 = smul.addr %s155, 64
          %s157 = scalar_lea.vmem [#allocation2], %s156
          %s158 = smul.u32 2, %s23
          %s160 = ssub.s32 1024, 1024
          %161 = vsyncadd %s154, %s160
          %s162 = smul.addr %s22, 8
          %s163 = sadd.s32 %s158, %s162
          %s164 = smul.addr %s163, 128
          %s165 = scalar_lea.hbm %s0, %s164
          %s166 = sshll.u32 %s157, 4
          %s167 = int_to_ptr.vmem [resolvable:$true] %s166
          %172 = dma.hbm_to_vmem [thread:$0]  %s165, 1024, %s167, %s154, 256, 256, 16
        $region28: #{tpu_custom_call.1} parent=23 // pred_fallthru
          _
      $region24: #{tpu_custom_call.1} parent=5 // pred_fallthru
        _
      %p173 = scmp.le.s32.totalorder 1, %s15
      %p174 = scmp.lt.s32.totalorder %s15, 3
      %p175 = pnand %p173, %p174
      %p176 = pneg %p175
      // Predicated region
      $region29: #{tpu_custom_call.1} parent=5 // pred_check
        _
      $region30: #{tpu_custom_call.1} parent=5 // pred_check_branch
        %178 = sbr.rel (%p175) target = $region32
      $region31: #{tpu_custom_call.1} parent=5 // pred_region
        %s179 = ssub.s32 %s15, 1
        %s180 = sand.u32 %s42, 1
        %s181 = scalar_lea.sflag [#allocation3], %s180
        %s182 = sand.u32 %s42, 1
        %s183 = smul.addr %s182, 64
        %s184 = scalar_lea.vmem [#allocation2], %s183
        // Predicated region
        $region33: #{tpu_custom_call.1} parent=31 // pred_check
          %p185 = pneg %p55
        $region34: #{tpu_custom_call.1} parent=31 // pred_check_branch
          %187 = sbr.rel (%p185) target = $region36
        $region35: #{tpu_custom_call.1} parent=31 // pred_region
          %188 = dma.done %s181, 1024
        $region36: #{tpu_custom_call.1} parent=31 // pred_fallthru
          _
        %s189 = sand.u32 %s42, 1
        %s190 = scalar_lea.sflag [#allocation3], %s189
        %s191 = sand.u32 %s42, 1
        %s192 = smul.addr %s191, 64
        %s193 = scalar_lea.vmem [#allocation2], %s192
        %p194 = pneg %p55
        %p195 = pneg %p52
        %p196 = pneg %p76
        %p197 = pneg %p73
        %p198 = pneg %p97
        %p199 = pneg %p94
        %p200 = pneg %p125
        %p201 = pneg %p122
        %s202 = sand.u32 %s112, 1
        %s203 = scalar_lea.sflag [#allocation4], %s202
        %s204 = sand.u32 %s112, 1
        %s205 = smul.addr %s204, 16
        %s206 = scalar_lea.vmem [#allocation5], %s205
        %s207 = smul.u32 2, %s25
        %s208 = smul.u32 2, %s25
        %v209 = vld [vmem:[%s1] sm:$0xff]
        %v210 = vld [vmem:[%s184] sm:$0xff]
        %v211 = vld [vmem:[%s184 + $0x8] sm:$0xff]
        %v212 = vld [vmem:[%s184 + $0x10] sm:$0xff]
        %v213 = vld [vmem:[%s184 + $0x18] sm:$0xff]
        %v214 = vld [vmem:[%s184 + $0x20] sm:$0xff]
        %v215 = vld [vmem:[%s184 + $0x28] sm:$0xff]
        %v216 = vld [vmem:[%s184 + $0x30] sm:$0xff]
        %v217 = vld [vmem:[%s184 + $0x38] sm:$0xff]
        %v218 = vld [vmem:[%s2] sm:$0xff]
        %220 = vset.pattern.permute.xlu0 0
        %221 = vperm.xlu0 %220, %v218
        %v222 = vpop.permute.xlu0 %221
        %vm224 = vcmask 261120
        %v226 = vsel %vm224, %v209, 0
        %228 = vmatprep.subr.mxu0 0.0
        %229 = vmatpush1.msra.mxu0 0.0
        %230 = vmatprep.subr.mxu0 0.0
        %231 = vmatpush1.msra.mxu0 0.0
        %232 = vmatprep.subr.mxu0 0.0
        %233 = vmatpush1.msra.mxu0 0.0
        %234 = vmatprep.subr.mxu0 0.0
        %235 = vmatpush1.msra.mxu0 0.0
        %236 = vmatprep.subr.mxu0 0.0
        %237 = vmatpush1.msra.mxu0 0.0
        %238 = vmatprep.subr.mxu0 0.0
        %239 = vmatpush1.msra.mxu0 0.0
        %240 = vmatprep.subr.mxu0 0.0
        %241 = vmatpush1.msra.mxu0 0.0
        %242 = vmatprep.subr.mxu0 0.0
        %243 = vmatpush1.msra.mxu0 0.0
        %244 = vmatprep.subr.mxu0 0.0
        %245 = vmatpush1.msra.mxu0 0.0
        %246 = vmatprep.subr.mxu0 0.0
        %247 = vmatpush1.msra.mxu0 0.0
        %248 = vmatprep.subr.mxu0 0.0
        %249 = vmatpush1.msra.mxu0 0.0
        %250 = vmatprep.subr.mxu0 0.0
        %251 = vmatpush1.msra.mxu0 0.0
        %252 = vmatprep.subr.mxu0 %v217
        %253 = vmatpush1.msra.mxu0 %v216
        %254 = vmatprep.subr.mxu0 %v215
        %255 = vmatpush1.msra.mxu0 %v214
        %256 = vmatprep.subr.mxu0 %v213
        %257 = vmatpush1.msra.mxu0 %v212
        %258 = vmatprep.subr.mxu0 %v211
        %259 = vmatpush1.msra.mxu0 %v210
        %260 = vmatprep.subr.mxu0 0.0
        %261 = vmatpush2.msra.mxu0 0.0
        %262 = vmatprep.subr.mxu0 0.0
        %263 = vmatpush2.msra.mxu0 0.0
        %264 = vmatprep.subr.mxu0 0.0
        %265 = vmatpush2.msra.mxu0 0.0
        %266 = vmatprep.subr.mxu0 0.0
        %267 = vmatpush2.msra.mxu0 0.0
        %268 = vmatprep.subr.mxu0 0.0
        %269 = vmatpush2.msra.mxu0 0.0
        %270 = vmatprep.subr.mxu0 0.0
        %271 = vmatpush2.msra.mxu0 0.0
        %272 = vmatprep.subr.mxu0 0.0
        %273 = vmatpush2.msra.mxu0 0.0
        %274 = vmatprep.subr.mxu0 0.0
        %275 = vmatpush2.msra.mxu0 0.0
        %276 = vmatprep.subr.mxu0 0.0
        %277 = vmatpush2.msra.mxu0 0.0
        %278 = vmatprep.subr.mxu0 0.0
        %279 = vmatpush2.msra.mxu0 0.0
        %280 = vmatprep.subr.mxu0 0.0
        %281 = vmatpush2.msra.mxu0 0.0
        %282 = vmatprep.subr.mxu0 0.0
        %283 = vmatpush2.msra.mxu0 0.0
        %284 = vmatprep.subr.mxu0 0.0
        %285 = vmatpush2.msra.mxu0 0.0
        %286 = vmatprep.subr.mxu0 0.0
        %287 = vmatpush2.msra.mxu0 0.0
        %288 = vmatprep.subr.mxu0 0.0
        %289 = vmatpush2.msra.mxu0 0.0
        %290 = vmatprep.subr.mxu0 0.0
        %291 = vmatpush2.msra.mxu0 0.0
        %292 = vmatprep.mubr.f32.mxu0 0.0
        %293 = vmatmul.mubr.f32.gmra.mxu0 %v226
        %v294 = vpop.f32.mrf.mxu0
        %v295 = vadd.f32 %v222, %v294
        %v296 = vpop.f32.mrf.mxu0
        %v297 = vadd.f32 %v222, %v296
        %298 = vdwg.mxu0
        %299 = vst [vmem:[%s206] sm:$0xff] %v295
        %300 = vst [vmem:[%s206 + $0x8] sm:$0xff] %v297
        %s301 = sand.u32 %s112, 1
        %s302 = scalar_lea.sflag [#allocation4], %s301
        %s303 = sand.u32 %s112, 1
        %s304 = smul.addr %s303, 16
        %s305 = scalar_lea.vmem [#allocation5], %s304
        // Predicated region
        $region37: #{tpu_custom_call.1} parent=31 // pred_check
          %p306 = pneg %p122
        $region38: #{tpu_custom_call.1} parent=31 // pred_check_branch
          %308 = sbr.rel (%p306) target = $region40
        $region39: #{tpu_custom_call.1} parent=31 // pred_region
          %s309 = smul.u32 2, %s25
          %s311 = ssub.s32 256, 256
          %312 = vsyncadd %s302, %s311
          %s313 = smul.addr %s24, 2
          %s314 = sadd.s32 %s309, %s313
          %s315 = smul.addr %s314, 128
          %s316 = scalar_lea.hbm %s3, %s315
          %s318 = sshll.u32 %s305, 4
          %s319 = int_to_ptr.vmem [resolvable:$true] %s318
          %321 = dma.vmem_to_hbm [thread:$0]  %s319, 256, %s316, %s302
        $region40: #{tpu_custom_call.1} parent=31 // pred_fallthru
          _
      $region32: #{tpu_custom_call.1} parent=5 // pred_fallthru
        _
      %p322 = scmp.le.s32.totalorder 2, %s15
      // Predicated region
      $region41: #{tpu_custom_call.1} parent=5 // pred_check
        %p323 = pneg %p322
      $region42: #{tpu_custom_call.1} parent=5 // pred_check_branch
        %325 = sbr.rel (%p323) target = $region44
      $region43: #{tpu_custom_call.1} parent=5 // pred_region
        %s326 = ssub.s32 %s15, 2
        // Predicated region
        $region45: #{tpu_custom_call.1} parent=43 // pred_check
          %p327 = pneg %p128
        $region46: #{tpu_custom_call.1} parent=43 // pred_check_branch
          %329 = sbr.rel (%p327) target = $region48
        $region47: #{tpu_custom_call.1} parent=43 // pred_region
          %s330 = sand.u32 %s113, 1
          %s331 = scalar_lea.sflag [#allocation4], %s330
          %s332 = sand.u32 %s113, 1
          %s333 = smul.addr %s332, 16
          %s334 = scalar_lea.vmem [#allocation5], %s333
          %335 = dma.done %s331, 256
        $region48: #{tpu_custom_call.1} parent=43 // pred_fallthru
          _
      $region44: #{tpu_custom_call.1} parent=5 // pred_fallthru
        _
    $region6: #{tpu_custom_call.1} parent=1 // loop_footer
      %s19 = sadd.s32 1, %s15
    $region7: #{tpu_custom_call.1} parent=1 // loop_footer_branch
      %14 = sbr.rel target = $region3
    $region8: #{tpu_custom_call.1} parent=1 // loop_exit
      _
    %336 = vsyncpa [#allocation3], 1
    %s337 = scalar_lea.sflag [#allocation3], 1
    %338 = vsyncpa %s337, 1
    %339 = vsyncpa [#allocation4], 1
    %s340 = scalar_lea.sflag [#allocation4], 1
    %341 = vsyncpa %s340, 1

</llo_original>
